<compile_context>
chip_gen: v5e
topology: v5e:2x2
jax: 0.10.0
libtpu: 0.0.40
codegen_flags: <defaults>
</compile_context>

<pallas_src>
import functools

import jax
import jax.numpy as jnp
from jax import lax
from jax.experimental import pallas as pl
from jax.experimental.pallas import tpu as pltpu


def _hpf_kernel(x_ref, w_ref, cmask_ref, rmask_ref, o_ref, *, kh, kw, ph, pw, H, W):
    """x_ref: (TPN, TPC, HW); w_ref: (kh*kw, TPC, 1) high-pass-folded weights;
    cmask_ref: (kw, 1, HW) column-validity masks; rmask_ref: (kh, 1, HW) row masks."""
    HW = H * W
    x = x_ref[...]
    xf = x if x.dtype == jnp.float32 else x.astype(jnp.float32)
    # TODO(synk): on v6e/v7x, bf16 inputs could stay bf16 through the tap
    # multiplies (bf16 VPU there); kept f32 for v5e compatibility / accuracy.

    # --- column pass: (kw-1) lane rolls, each masked by one broadcast mul ---
    ys = []
    for j in range(kw):
        dj = j - pw
        if dj == 0:
            ys.append(xf)
        else:
            shifted = pltpu.roll(xf, (-dj) % HW, axis=2)
            ys.append(shifted * cmask_ref[j])          # (1, HW) broadcast

    # --- per-row weighted inner sums + (kh-1) row rolls (multiples of W) ----
    acc = None
    for i in range(kh):
        di = i - ph
        s = None
        for j in range(kw):
            term = w_ref[i * kw + j] * ys[j]           # (TPC, 1) broadcast
            s = term if s is None else s + term
        if di != 0:
            s = pltpu.roll(s, (-(di * W)) % HW, axis=2) * rmask_ref[i]
        acc = s if acc is None else acc + s

    o_ref[...] = acc.astype(o_ref.dtype)


def _divisors(n):
    return [d for d in range(1, n + 1) if n % d == 0]


def _choose_blocks(N, C, HW, elem_bytes, budget_bytes=1 << 20):
    """Pick (TPN, TPC) obeying BlockSpec tiling rules, ~budget per block,
    and (when possible) >=2 grid steps so both v7x TensorCores are used."""
    plane_bytes = HW * max(elem_bytes, 4)          # f32 work copy dominates
    max_planes = max(1, budget_bytes // plane_bytes)
    # Channel (sublane) block dim must equal C or be a multiple of 8.
    c_cands = [d for d in _divisors(C) if d == C or d % 8 == 0]
    c_fit = [d for d in c_cands if d <= max_planes]
    tpc = max(c_fit) if c_fit else min(c_cands)
    max_n = max(1, max_planes // tpc)
    tpn = max(d for d in _divisors(N) if d <= max_n)
    # Guarantee >=2 grid steps (2 TensorCores on v7x) when the problem allows.
    if (N // tpn) * (C // tpc) < 2:
        n_divs = sorted(d for d in _divisors(N) if d < tpn)
        if n_divs:
            tpn = n_divs[-1]
        else:
            c_smaller = sorted(d for d in c_cands if d < tpc)
            if c_smaller:
                tpc = c_smaller[-1]
    return tpn, tpc


def high_pass_filter(x, weight, kernel_size):
    """x: (N, C, H, W); weight: (C, 1, kh, kw) as in the nn.Module."""
    kh, kw = kernel_size
    if kh % 2 != 1 or kw % 2 != 1:
        raise ValueError("HighPassFilter requires odd kernel sizes "
                         "(output shape must match the input).")
    ph, pw = (kh - 1) // 2, (kw - 1) // 2
    N, C, H, W = x.shape
    HW = H * W

    # TODO(synk): for planes too large for one VMEM block (notably v7x's 64 MiB
    # VMEM), additionally tile H with a ph-row halo (pl.Element maps / manual DMA).
    # TODO(synk): when W >= 128 it can be better to keep (H, W) as trailing dims
    # so the (kh-1) row shifts become sublane shifts; lane-flattened layout kept
    # here since the test plane is small (HW is a multiple of 128).
    x_flat = x.reshape(N, C, HW)                                   # free reshape

    # Fold the high-pass into the weights: center tap -> 1 - w, others -> -w,
    # so the kernel output is directly  sum(w'' * shifted)  (= x - blur).
    w_mat = weight.reshape(C, kh * kw).astype(jnp.float32)         # (C, kh*kw)
    w_hp = -w_mat
    w_hp = w_hp.at[:, ph * kw + pw].add(1.0)
    w_taps = jnp.transpose(w_hp, (1, 0)).reshape(kh * kw, C, 1)    # (kh*kw, C, 1)

    # Host-precomputed zero-padding masks, lane-only shape (1, HW), f32.
    col = jnp.arange(HW, dtype=jnp.int32) % W
    row = jnp.arange(HW, dtype=jnp.int32) // W
    cmask = jnp.stack([
        ((col >= max(0, -(j - pw))) & (col < W - max(0, j - pw))).astype(jnp.float32)
        for j in range(kw)
    ]).reshape(kw, 1, HW)
    rmask = jnp.stack([
        ((row >= max(0, -(i - ph))) & (row < H - max(0, i - ph))).astype(jnp.float32)
        for i in range(kh)
    ]).reshape(kh, 1, HW)

    itemsize = jnp.dtype(x.dtype).itemsize
    tpn, tpc = _choose_blocks(N, C, HW, itemsize)
    grid = (C // tpc, N // tpn)            # channel axis SLOW: weight tile is
                                           # re-used (not re-DMA'd) across n steps.

    # VMEM budget: 2x in + 2x out double buffers plus ~(kw+4) full-block f32
    # temporaries (xf, ys, S, acc) -> ~12x the f32 block bytes; cap below the
    # v7x 64 MiB physical VMEM.
    f32_block_bytes = tpn * tpc * HW * 4
    vmem_limit = int(min(48 << 20, max(16 << 20, 12 * f32_block_bytes)))

    kernel = functools.partial(_hpf_kernel, kh=kh, kw=kw, ph=ph, pw=pw, H=H, W=W)

    out_flat = pl.pallas_call(
        kernel,
        out_shape=jax.ShapeDtypeStruct((N, C, HW), x.dtype),
        grid_spec=pltpu.PrefetchScalarGridSpec(
            num_scalar_prefetch=0,
            grid=grid,
            in_specs=[
                pl.BlockSpec((tpn, tpc, HW), lambda c, n: (n, c, 0)),
                pl.BlockSpec((kh * kw, tpc, 1), lambda c, n: (0, c, 0)),
                pl.BlockSpec((kw, 1, HW), lambda c, n: (0, 0, 0)),
                pl.BlockSpec((kh, 1, HW), lambda c, n: (0, 0, 0)),
            ],
            out_specs=pl.BlockSpec((tpn, tpc, HW), lambda c, n: (n, c, 0)),
        ),
        compiler_params=pltpu.CompilerParams(
            dimension_semantics=("parallel", "parallel"),
            vmem_limit_bytes=vmem_limit),
        cost_estimate=pl.CostEstimate(
            flops=int(N * C * HW * (2 * kh * kw + 2 * (kh + kw))),
            transcendentals=0,
            bytes_accessed=int(2 * N * C * HW * itemsize
                               + w_taps.size * 4 + (cmask.size + rmask.size) * 4)),
    )(x_flat, w_taps, cmask, rmask)

    return out_flat.reshape(N, C, H, W)


def _reference(x, weight, kernel_size):
    # Pure-JAX reference: depthwise conv2d with zero padding, then x - blur.
    kh, kw = kernel_size
    ph, pw = (kh - 1) // 2, (kw - 1) // 2
    C = x.shape[1]
    blur = lax.conv_general_dilated(
        x, weight, window_strides=(1, 1),
        padding=((ph, ph), (pw, pw)),
        dimension_numbers=("NCHW", "OIHW", "NCHW"),
        feature_group_count=C)
    return x - blur


if __name__ == "__main__":
    N, C, H, W = 2, 4, 16, 16
    kernel_size = (3, 3)
    kh, kw = kernel_size

    key = jax.random.PRNGKey(0)
    kx, kwn = jax.random.split(key)
    x = jax.random.normal(kx, (N, C, H, W), dtype=jnp.float32)

    # Deterministic parameter init, exactly as in __init__:
    # ones(kh, kw) / sum -> view(1,1,kh,kw) -> repeat(C,1,1,1)
    box = jnp.ones((kh, kw), jnp.float32)
    box = box / jnp.sum(box)
    weight = jnp.tile(box.reshape(1, 1, kh, kw), (C, 1, 1, 1))      # (C, 1, kh, kw)

    out = jax.block_until_ready(high_pass_filter(x, weight, kernel_size))
    ref = _reference(x, weight, kernel_size)
    assert out.shape == (N, C, H, W)
    assert jnp.allclose(out, ref, atol=1e-5, rtol=1e-5)

    # Non-uniform (trained) per-channel weights.
    weight2 = weight + 0.05 * jax.random.normal(kwn, weight.shape, jnp.float32)
    out2 = jax.block_until_ready(high_pass_filter(x, weight2, kernel_size))
    ref2 = _reference(x, weight2, kernel_size)
    assert jnp.allclose(out2, ref2, atol=1e-5, rtol=1e-5)

    # Asymmetric kernel exercises the separable column/row passes independently.
    ks3 = (3, 5)
    box3 = jnp.ones(ks3, jnp.float32)
    box3 = box3 / jnp.sum(box3)
    weight3 = jnp.tile(box3.reshape(1, 1, *ks3), (C, 1, 1, 1))
    out3 = jax.block_until_ready(high_pass_filter(x, weight3, ks3))
    ref3 = _reference(x, weight3, ks3)
    assert jnp.allclose(out3, ref3, atol=1e-5, rtol=1e-5)

    print("KERNEL_OK")
</pallas_src>

<mosaic_0001>
module attributes {stable_mosaic.version = 11 : i64} {
  func.func @_hpf_kernel(%arg0: i32, %arg1: i32, %arg2: memref<1x4x256xf32, #tpu.memory_space<vmem>>, %arg3: memref<9x4x1xf32, #tpu.memory_space<vmem>>, %arg4: memref<3x1x256xf32, #tpu.memory_space<vmem>>, %arg5: memref<3x1x256xf32, #tpu.memory_space<vmem>>, %arg6: memref<1x4x256xf32, #tpu.memory_space<vmem>>) attributes {dimension_semantics = [#tpu.dimension_semantics<parallel>, #tpu.dimension_semantics<parallel>], iteration_bounds = array<i64: 1, 2>, scalar_prefetch = 0 : i64, scratch_operands = 0 : i64, tpu.core_type = #tpu.core_type<tc>, window_params = [{transform_indices = @transform_0, window_bounds = array<i64: 1, 4, 256>}, {transform_indices = @transform_1, window_bounds = array<i64: 9, 4, 1>}, {pipeline_mode = #tpu.pipeline_mode<synchronous>, transform_indices = @transform_2, window_bounds = array<i64: 3, 1, 256>}, {pipeline_mode = #tpu.pipeline_mode<synchronous>, transform_indices = @transform_3, window_bounds = array<i64: 3, 1, 256>}, {transform_indices = @transform_4, window_bounds = array<i64: 1, 4, 256>}]} {
    %c0 = arith.constant 0 : index
    %c0_0 = arith.constant 0 : index
    %c0_1 = arith.constant 0 : index
    %0 = vector.load %arg2[%c0, %c0_0, %c0_1] : memref<1x4x256xf32, #tpu.memory_space<vmem>>, vector<1x4x256xf32>
    %c1_i32 = arith.constant 1 : i32
    %1 = tpu.dynamic_rotate %0 by %c1_i32 dim 2 : vector<1x4x256xf32>, i32 -> vector<1x4x256xf32>
    %c0_2 = arith.constant 0 : index
    %c0_3 = arith.constant 0 : index
    %c0_4 = arith.constant 0 : index
    %2 = vector.load %arg4[%c0_2, %c0_3, %c0_4] : memref<3x1x256xf32, #tpu.memory_space<vmem>>, vector<1x1x256xf32>
    %3 = vector.shape_cast %2 : vector<1x1x256xf32> to vector<1x256xf32>
    %4 = vector.shape_cast %3 : vector<1x256xf32> to vector<1x1x256xf32>
    %5 = vector.broadcast %4 : vector<1x1x256xf32> to vector<1x4x256xf32>
    %6 = arith.mulf %1, %5 : vector<1x4x256xf32>
    %c255_i32 = arith.constant 255 : i32
    %7 = tpu.dynamic_rotate %0 by %c255_i32 dim 2 : vector<1x4x256xf32>, i32 -> vector<1x4x256xf32>
    %c2 = arith.constant 2 : index
    %c0_5 = arith.constant 0 : index
    %c0_6 = arith.constant 0 : index
    %8 = vector.load %arg4[%c2, %c0_5, %c0_6] : memref<3x1x256xf32, #tpu.memory_space<vmem>>, vector<1x1x256xf32>
    %9 = vector.shape_cast %8 : vector<1x1x256xf32> to vector<1x256xf32>
    %10 = vector.shape_cast %9 : vector<1x256xf32> to vector<1x1x256xf32>
    %11 = vector.broadcast %10 : vector<1x1x256xf32> to vector<1x4x256xf32>
    %12 = arith.mulf %7, %11 : vector<1x4x256xf32>
    %c0_7 = arith.constant 0 : index
    %c0_8 = arith.constant 0 : index
    %c0_9 = arith.constant 0 : index
    %13 = vector.load %arg3[%c0_7, %c0_8, %c0_9] : memref<9x4x1xf32, #tpu.memory_space<vmem>>, vector<1x4x1xf32>
    %14 = vector.shape_cast %13 : vector<1x4x1xf32> to vector<4x1xf32>
    %15 = vector.shape_cast %14 : vector<4x1xf32> to vector<1x4x1xf32>
    %16 = vector.broadcast %15 : vector<1x4x1xf32> to vector<1x4x256xf32>
    %17 = arith.mulf %16, %6 : vector<1x4x256xf32>
    %c1 = arith.constant 1 : index
    %c0_10 = arith.constant 0 : index
    %c0_11 = arith.constant 0 : index
    %18 = vector.load %arg3[%c1, %c0_10, %c0_11] : memref<9x4x1xf32, #tpu.memory_space<vmem>>, vector<1x4x1xf32>
    %19 = vector.shape_cast %18 : vector<1x4x1xf32> to vector<4x1xf32>
    %20 = vector.shape_cast %19 : vector<4x1xf32> to vector<1x4x1xf32>
    %21 = vector.broadcast %20 : vector<1x4x1xf32> to vector<1x4x256xf32>
    %22 = arith.mulf %21, %0 : vector<1x4x256xf32>
    %23 = arith.addf %17, %22 : vector<1x4x256xf32>
    %c2_12 = arith.constant 2 : index
    %c0_13 = arith.constant 0 : index
    %c0_14 = arith.constant 0 : index
    %24 = vector.load %arg3[%c2_12, %c0_13, %c0_14] : memref<9x4x1xf32, #tpu.memory_space<vmem>>, vector<1x4x1xf32>
    %25 = vector.shape_cast %24 : vector<1x4x1xf32> to vector<4x1xf32>
    %26 = vector.shape_cast %25 : vector<4x1xf32> to vector<1x4x1xf32>
    %27 = vector.broadcast %26 : vector<1x4x1xf32> to vector<1x4x256xf32>
    %28 = arith.mulf %27, %12 : vector<1x4x256xf32>
    %29 = arith.addf %23, %28 : vector<1x4x256xf32>
    %c16_i32 = arith.constant 16 : i32
    %30 = tpu.dynamic_rotate %29 by %c16_i32 dim 2 : vector<1x4x256xf32>, i32 -> vector<1x4x256xf32>
    %c0_15 = arith.constant 0 : index
    %c0_16 = arith.constant 0 : index
    %c0_17 = arith.constant 0 : index
    %31 = vector.load %arg5[%c0_15, %c0_16, %c0_17] : memref<3x1x256xf32, #tpu.memory_space<vmem>>, vector<1x1x256xf32>
    %32 = vector.shape_cast %31 : vector<1x1x256xf32> to vector<1x256xf32>
    %33 = vector.shape_cast %32 : vector<1x256xf32> to vector<1x1x256xf32>
    %34 = vector.broadcast %33 : vector<1x1x256xf32> to vector<1x4x256xf32>
    %35 = arith.mulf %30, %34 : vector<1x4x256xf32>
    %c3 = arith.constant 3 : index
    %c0_18 = arith.constant 0 : index
    %c0_19 = arith.constant 0 : index
    %36 = vector.load %arg3[%c3, %c0_18, %c0_19] : memref<9x4x1xf32, #tpu.memory_space<vmem>>, vector<1x4x1xf32>
    %37 = vector.shape_cast %36 : vector<1x4x1xf32> to vector<4x1xf32>
    %38 = vector.shape_cast %37 : vector<4x1xf32> to vector<1x4x1xf32>
    %39 = vector.broadcast %38 : vector<1x4x1xf32> to vector<1x4x256xf32>
    %40 = arith.mulf %39, %6 : vector<1x4x256xf32>
    %c4 = arith.constant 4 : index
    %c0_20 = arith.constant 0 : index
    %c0_21 = arith.constant 0 : index
    %41 = vector.load %arg3[%c4, %c0_20, %c0_21] : memref<9x4x1xf32, #tpu.memory_space<vmem>>, vector<1x4x1xf32>
    %42 = vector.shape_cast %41 : vector<1x4x1xf32> to vector<4x1xf32>
    %43 = vector.shape_cast %42 : vector<4x1xf32> to vector<1x4x1xf32>
    %44 = vector.broadcast %43 : vector<1x4x1xf32> to vector<1x4x256xf32>
    %45 = arith.mulf %44, %0 : vector<1x4x256xf32>
    %46 = arith.addf %40, %45 : vector<1x4x256xf32>
    %c5 = arith.constant 5 : index
    %c0_22 = arith.constant 0 : index
    %c0_23 = arith.constant 0 : index
    %47 = vector.load %arg3[%c5, %c0_22, %c0_23] : memref<9x4x1xf32, #tpu.memory_space<vmem>>, vector<1x4x1xf32>
    %48 = vector.shape_cast %47 : vector<1x4x1xf32> to vector<4x1xf32>
    %49 = vector.shape_cast %48 : vector<4x1xf32> to vector<1x4x1xf32>
    %50 = vector.broadcast %49 : vector<1x4x1xf32> to vector<1x4x256xf32>
    %51 = arith.mulf %50, %12 : vector<1x4x256xf32>
    %52 = arith.addf %46, %51 : vector<1x4x256xf32>
    %53 = arith.addf %35, %52 : vector<1x4x256xf32>
    %c6 = arith.constant 6 : index
    %c0_24 = arith.constant 0 : index
    %c0_25 = arith.constant 0 : index
    %54 = vector.load %arg3[%c6, %c0_24, %c0_25] : memref<9x4x1xf32, #tpu.memory_space<vmem>>, vector<1x4x1xf32>
    %55 = vector.shape_cast %54 : vector<1x4x1xf32> to vector<4x1xf32>
    %56 = vector.shape_cast %55 : vector<4x1xf32> to vector<1x4x1xf32>
    %57 = vector.broadcast %56 : vector<1x4x1xf32> to vector<1x4x256xf32>
    %58 = arith.mulf %57, %6 : vector<1x4x256xf32>
    %c7 = arith.constant 7 : index
    %c0_26 = arith.constant 0 : index
    %c0_27 = arith.constant 0 : index
    %59 = vector.load %arg3[%c7, %c0_26, %c0_27] : memref<9x4x1xf32, #tpu.memory_space<vmem>>, vector<1x4x1xf32>
    %60 = vector.shape_cast %59 : vector<1x4x1xf32> to vector<4x1xf32>
    %61 = vector.shape_cast %60 : vector<4x1xf32> to vector<1x4x1xf32>
    %62 = vector.broadcast %61 : vector<1x4x1xf32> to vector<1x4x256xf32>
    %63 = arith.mulf %62, %0 : vector<1x4x256xf32>
    %64 = arith.addf %58, %63 : vector<1x4x256xf32>
    %c8 = arith.constant 8 : index
    %c0_28 = arith.constant 0 : index
    %c0_29 = arith.constant 0 : index
    %65 = vector.load %arg3[%c8, %c0_28, %c0_29] : memref<9x4x1xf32, #tpu.memory_space<vmem>>, vector<1x4x1xf32>
    %66 = vector.shape_cast %65 : vector<1x4x1xf32> to vector<4x1xf32>
    %67 = vector.shape_cast %66 : vector<4x1xf32> to vector<1x4x1xf32>
    %68 = vector.broadcast %67 : vector<1x4x1xf32> to vector<1x4x256xf32>
    %69 = arith.mulf %68, %12 : vector<1x4x256xf32>
    %70 = arith.addf %64, %69 : vector<1x4x256xf32>
    %c240_i32 = arith.constant 240 : i32
    %71 = tpu.dynamic_rotate %70 by %c240_i32 dim 2 : vector<1x4x256xf32>, i32 -> vector<1x4x256xf32>
    %c2_30 = arith.constant 2 : index
    %c0_31 = arith.constant 0 : index
    %c0_32 = arith.constant 0 : index
    %72 = vector.load %arg5[%c2_30, %c0_31, %c0_32] : memref<3x1x256xf32, #tpu.memory_space<vmem>>, vector<1x1x256xf32>
    %73 = vector.shape_cast %72 : vector<1x1x256xf32> to vector<1x256xf32>
    %74 = vector.shape_cast %73 : vector<1x256xf32> to vector<1x1x256xf32>
    %75 = vector.broadcast %74 : vector<1x1x256xf32> to vector<1x4x256xf32>
    %76 = arith.mulf %71, %75 : vector<1x4x256xf32>
    %77 = arith.addf %53, %76 : vector<1x4x256xf32>
    %c0_33 = arith.constant 0 : index
    %c0_34 = arith.constant 0 : index
    %c0_35 = arith.constant 0 : index
    %78 = vector.load %arg6[%c0_33, %c0_34, %c0_35] : memref<1x4x256xf32, #tpu.memory_space<vmem>>, vector<1x4x256xf32>
    tpu.vector_store %arg6[%c0_33, %c0_34, %c0_35], %77 {strides = array<i32>} : memref<1x4x256xf32, #tpu.memory_space<vmem>>, vector<1x4x256xf32>,
    return
  }
  func.func @transform_0(%arg0: i32, %arg1: i32) -> (i32, i32, i32) {
    %c0_i32 = arith.constant 0 : i32
    %c0_i32_0 = arith.constant 0 : i32
    return %arg1, %arg0, %c0_i32 : i32, i32, i32
  }
  func.func @transform_1(%arg0: i32, %arg1: i32) -> (i32, i32, i32) {
    %c0_i32 = arith.constant 0 : i32
    %c0_i32_0 = arith.constant 0 : i32
    %c0_i32_1 = arith.constant 0 : i32
    return %c0_i32, %arg0, %c0_i32_0 : i32, i32, i32
  }
  func.func @transform_2(%arg0: i32, %arg1: i32) -> (i32, i32, i32) {
    %c0_i32 = arith.constant 0 : i32
    %c0_i32_0 = arith.constant 0 : i32
    %c0_i32_1 = arith.constant 0 : i32
    %c0_i32_2 = arith.constant 0 : i32
    return %c0_i32, %c0_i32_0, %c0_i32_1 : i32, i32, i32
  }
  func.func @transform_3(%arg0: i32, %arg1: i32) -> (i32, i32, i32) {
    %c0_i32 = arith.constant 0 : i32
    %c0_i32_0 = arith.constant 0 : i32
    %c0_i32_1 = arith.constant 0 : i32
    %c0_i32_2 = arith.constant 0 : i32
    return %c0_i32, %c0_i32_0, %c0_i32_1 : i32, i32, i32
  }
  func.func @transform_4(%arg0: i32, %arg1: i32) -> (i32, i32, i32) {
    %c0_i32 = arith.constant 0 : i32
    %c0_i32_0 = arith.constant 0 : i32
    return %arg1, %arg0, %c0_i32 : i32, i32, i32
  }
}

</mosaic_0001>

<llo_original>
// kernel: tpu_custom_call.1
$region0: #{tpu_custom_call.1}
  #allocation0 [shape = 'u32[]', space=smem, size = 0x4, offset = 0x4, fixed_abs, tag = 'smem constant byte address 0x4 - core index']
  #allocation1 [shape = 'u32[72,128]{1,0:T(1,128)}', space=vmem, size = 0x9000, scoped, tag = 'internal scratch']
  %s0 = inlined_call_operand.vmem [shape: f32[2,4,256], index: 0, kind: input, shape index: {}]
  %s1 = inlined_call_operand.vmem [shape: f32[9,4,1], index: 1, kind: input, shape index: {}]
  %s2 = inlined_call_operand.vmem [shape: f32[3,1,256], index: 2, kind: input, shape index: {}]
  %s3 = inlined_call_operand.vmem [shape: f32[3,1,256], index: 3, kind: input, shape index: {}]
  %s4 = inlined_call_operand.hbm [shape: f32[2,4,256], index: 4, kind: output, shape index: {}]
  %s5 = sld [smem:[#allocation0]]
  $region49: #{tpu_custom_call.1} parent=0
    _
  %s7 = ssub.s32 1, %s5
  %s8 = scalar_select 0, %s7, %s5
  $region1: #{tpu_custom_call.1} parent=0
    #allocation2 [shape = 'u8[8192]{0}', space=vmem, size = 0x2000, scoped, tag = 'output window, operand 0']
    #allocation3 [shape = 's32[2]{0}', space=sflag, size = 0x8, scoped, tag = 'scoped memory for tpu_custom_call.1']
    %9 = vsyncpa [#allocation3], 0
    %s10 = scalar_lea.sflag [#allocation3], 1
    %11 = vsyncpa %s10, 0
    loop: start=0, step=1, limit=4
    $region2: #{tpu_custom_call.1} parent=1 // loop_pre_header
      _
    $region3: #{tpu_custom_call.1} parent=1 // loop_header
      %s13 = sphi 0, %s17
      %p14 = scmp.ge.s32.totalorder %s13, 4
      %s20 = sphi 0, %s32
      %s21 = sphi 0, %s28
      %s22 = sphi 0, %s20
      %s23 = sphi 0, %s21
      %s24 = sphi 0, %s22
      %s25 = sphi 0, %s23
      %s37 = sphi 0, %s39
      %s40 = sphi 0, %s37
      %s41 = sphi 0, %s40
      %s57 = sphi 0, %s41
      %s63 = sphi 0, %s65
      %s66 = sphi 0, %s63
      %s67 = sphi 0, %s66
      %s83 = sphi 0, %s67
      %s87 = sphi 0, %s87
      %s89 = sphi 0, %s87
      %s90 = sphi 0, %s89
      %s104 = sphi 0, %s90
      %s108 = sphi 0, %s108
      %s110 = sphi 0, %s108
      %s111 = sphi 0, %s110
      %s125 = sphi 0, %s111
      %s133 = sphi 0, %s135
      %s136 = sphi 0, %s133
      %s137 = sphi 0, %s136
      %s153 = sphi 0, %s137
    $region4: #{tpu_custom_call.1} parent=1 // loop_header_branch
      %16 = sbr.rel (%p14) target = $region8
    $region5: #{tpu_custom_call.1} parent=1 // loop_body
      %s18 = ssub.s32 %s13, 1
      %s19 = ssub.s32 %s13, 2
      %s26 = sadd.s32 1, %s21
      %p27 = scmp.ge.s32.totalorder %s26, 2
      %s28 = scalar_select %p27, 0, %s26
      %s29 = sadd.s32 1, %s20
      %s30 = scalar_select %p27, %s29, %s20
      %p31 = scmp.ge.s32.totalorder %s30, 1
      %s32 = scalar_select %p31, 0, %s30
      %s33 = ssub.s32 %s21, %s28
      %s34 = ssub.s32 %s20, %s32
      %s35 = sor.u32 %s33, %s34
      %p36 = scmp.eq.s32.totalorder %s35, 0
      %s38 = sadd.s32 %s37, 1
      %s39 = scalar_select %p36, %s37, %s38
      %p42 = pneg %p36
      %p43 = scmp.eq.s32.totalorder %s13, 1
      %p44 = por %p42, %p43
      %p45 = scmp.ne.s32.totalorder %s37, %s40
      %p46 = scmp.eq.s32.totalorder %s13, 0
      %p47 = por %p45, %p46
      %p48 = scmp.ne.s32.totalorder %s37, %s40
      %p49 = scmp.eq.s32.totalorder %s18, 1
      %p50 = por %p48, %p49
      %p51 = scmp.ne.s32.totalorder %s40, %s41
      %p52 = scmp.eq.s32.totalorder %s18, 0
      %p53 = por %p51, %p52
      %p54 = scmp.ne.s32.totalorder %s40, %s41
      %p55 = scmp.eq.s32.totalorder %s19, 1
      %p56 = por %p54, %p55
      %p58 = scmp.ne.s32.totalorder %s41, %s57
      %p59 = scmp.eq.s32.totalorder %s19, 0
      %p60 = por %p58, %p59
      %s61 = ssub.s32 %s20, %s32
      %p62 = scmp.eq.s32.totalorder %s61, 0
      %s64 = sadd.s32 %s63, 1
      %s65 = scalar_select %p62, %s63, %s64
      %p68 = pneg %p62
      %p69 = scmp.eq.s32.totalorder %s13, 1
      %p70 = por %p68, %p69
      %p71 = scmp.ne.s32.totalorder %s63, %s66
      %p72 = scmp.eq.s32.totalorder %s13, 0
      %p73 = por %p71, %p72
      %p74 = scmp.ne.s32.totalorder %s63, %s66
      %p75 = scmp.eq.s32.totalorder %s18, 1
      %p76 = por %p74, %p75
      %p77 = scmp.ne.s32.totalorder %s66, %s67
      %p78 = scmp.eq.s32.totalorder %s18, 0
      %p79 = por %p77, %p78
      %p80 = scmp.ne.s32.totalorder %s66, %s67
      %p81 = scmp.eq.s32.totalorder %s19, 1
      %p82 = por %p80, %p81
      %p84 = scmp.ne.s32.totalorder %s67, %s83
      %p85 = scmp.eq.s32.totalorder %s19, 0
      %p86 = por %p84, %p85
      %s88 = sadd.s32 %s87, 1
      %p91 = scmp.eq.s32.totalorder %s13, 1
      %p92 = scmp.ne.s32.totalorder %s87, %s89
      %p93 = scmp.eq.s32.totalorder %s13, 0
      %p94 = por %p92, %p93
      %p95 = scmp.ne.s32.totalorder %s87, %s89
      %p96 = scmp.eq.s32.totalorder %s18, 1
      %p97 = por %p95, %p96
      %p98 = scmp.ne.s32.totalorder %s89, %s90
      %p99 = scmp.eq.s32.totalorder %s18, 0
      %p100 = por %p98, %p99
      %p101 = scmp.ne.s32.totalorder %s89, %s90
      %p102 = scmp.eq.s32.totalorder %s19, 1
      %p103 = por %p101, %p102
      %p105 = scmp.ne.s32.totalorder %s90, %s104
      %p106 = scmp.eq.s32.totalorder %s19, 0
      %p107 = por %p105, %p106
      %s109 = sadd.s32 %s108, 1
      %p112 = scmp.eq.s32.totalorder %s13, 1
      %p113 = scmp.ne.s32.totalorder %s108, %s110
      %p114 = scmp.eq.s32.totalorder %s13, 0
      %p115 = por %p113, %p114
      %p116 = scmp.ne.s32.totalorder %s108, %s110
      %p117 = scmp.eq.s32.totalorder %s18, 1
      %p118 = por %p116, %p117
      %p119 = scmp.ne.s32.totalorder %s110, %s111
      %p120 = scmp.eq.s32.totalorder %s18, 0
      %p121 = por %p119, %p120
      %p122 = scmp.ne.s32.totalorder %s110, %s111
      %p123 = scmp.eq.s32.totalorder %s19, 1
      %p124 = por %p122, %p123
      %p126 = scmp.ne.s32.totalorder %s111, %s125
      %p127 = scmp.eq.s32.totalorder %s19, 0
      %p128 = por %p126, %p127
      %s129 = ssub.s32 %s21, %s28
      %s130 = ssub.s32 %s20, %s32
      %s131 = sor.u32 %s129, %s130
      %p132 = scmp.eq.s32.totalorder %s131, 0
      %s134 = sadd.s32 %s133, 1
      %s135 = scalar_select %p132, %s133, %s134
      %p138 = pneg %p132
      %p139 = scmp.eq.s32.totalorder %s13, 1
      %p140 = por %p138, %p139
      %p141 = scmp.ne.s32.totalorder %s133, %s136
      %p142 = scmp.eq.s32.totalorder %s13, 0
      %p143 = por %p141, %p142
      %p144 = scmp.ne.s32.totalorder %s133, %s136
      %p145 = scmp.eq.s32.totalorder %s18, 1
      %p146 = por %p144, %p145
      %p147 = scmp.ne.s32.totalorder %s136, %s137
      %p148 = scmp.eq.s32.totalorder %s18, 0
      %p149 = por %p147, %p148
      %p150 = scmp.ne.s32.totalorder %s136, %s137
      %p151 = scmp.eq.s32.totalorder %s19, 1
      %p152 = por %p150, %p151
      %p154 = scmp.ne.s32.totalorder %s137, %s153
      %p155 = scmp.eq.s32.totalorder %s19, 0
      %p156 = por %p154, %p155
      %p157 = scmp.le.s32.totalorder 1, %s13
      %p158 = scmp.lt.s32.totalorder %s13, 3
      %p159 = pnand %p157, %p158
      %p160 = pneg %p159
      // Predicated region
      $region9: #{tpu_custom_call.1} parent=5 // pred_check
        _
      $region10: #{tpu_custom_call.1} parent=5 // pred_check_branch
        %162 = sbr.rel (%p159) target = $region12
      $region11: #{tpu_custom_call.1} parent=5 // pred_region
        %s163 = ssub.s32 %s13, 1
        // Predicated region
        $region13: #{tpu_custom_call.1} parent=11 // pred_check
          %p164 = pneg %p79
        $region14: #{tpu_custom_call.1} parent=11 // pred_check_branch
          %166 = sbr.rel (%p164) target = $region16
        $region15: #{tpu_custom_call.1} parent=11 // pred_region
          %p167 = scmp.lt.s32.totalorder %s22, 0
          %s168 = scalar_select %p167, %s22, 0
          %s169 = smul.addr %s168, 4
          %s170 = scalar_lea.vmem %s1, %s169
        $region16: #{tpu_custom_call.1} parent=11 // pred_fallthru
          _
        // Predicated region
        $region17: #{tpu_custom_call.1} parent=11 // pred_check
          %p171 = pneg %p100
        $region18: #{tpu_custom_call.1} parent=11 // pred_check_branch
          %173 = sbr.rel (%p171) target = $region20
        $region19: #{tpu_custom_call.1} parent=11 // pred_region
          _
        $region20: #{tpu_custom_call.1} parent=11 // pred_fallthru
          _
        // Predicated region
        $region21: #{tpu_custom_call.1} parent=11 // pred_check
          %p174 = pneg %p121
        $region22: #{tpu_custom_call.1} parent=11 // pred_check_branch
          %176 = sbr.rel (%p174) target = $region24
        $region23: #{tpu_custom_call.1} parent=11 // pred_region
          _
        $region24: #{tpu_custom_call.1} parent=11 // pred_fallthru
          _
      $region12: #{tpu_custom_call.1} parent=5 // pred_fallthru
        _
      %p177 = scmp.lt.s32.totalorder %s13, 2
      // Predicated region
      $region25: #{tpu_custom_call.1} parent=5 // pred_check
        %p178 = pneg %p177
      $region26: #{tpu_custom_call.1} parent=5 // pred_check_branch
        %180 = sbr.rel (%p178) target = $region28
      $region27: #{tpu_custom_call.1} parent=5 // pred_region
        // Predicated region
        $region29: #{tpu_custom_call.1} parent=27 // pred_check
          %p181 = pneg %p47
        $region30: #{tpu_custom_call.1} parent=27 // pred_check_branch
          %183 = sbr.rel (%p181) target = $region32
        $region31: #{tpu_custom_call.1} parent=27 // pred_region
          %p184 = scmp.lt.s32.totalorder %s21, 1
          %s185 = scalar_select %p184, %s21, 1
          %p186 = scmp.lt.s32.totalorder %s20, 0
          %s187 = scalar_select %p186, %s20, 0
          %s188 = smul.addr %s187, 2
          %s189 = smul.addr %s185, 2
          %s190 = sadd.s32 %s188, %s189
          %s191 = smul.addr %s190, 4
          %s192 = scalar_lea.vmem %s0, %s191
        $region32: #{tpu_custom_call.1} parent=27 // pred_fallthru
          _
      $region28: #{tpu_custom_call.1} parent=5 // pred_fallthru
        _
      %p193 = scmp.le.s32.totalorder 1, %s13
      %p194 = scmp.lt.s32.totalorder %s13, 3
      %p195 = pnand %p193, %p194
      %p196 = pneg %p195
      // Predicated region
      $region33: #{tpu_custom_call.1} parent=5 // pred_check
        _
      $region34: #{tpu_custom_call.1} parent=5 // pred_check_branch
        %198 = sbr.rel (%p195) target = $region36
      $region35: #{tpu_custom_call.1} parent=5 // pred_region
        %s199 = ssub.s32 %s13, 1
        %p200 = scmp.lt.s32.totalorder %s23, 1
        %s201 = scalar_select %p200, %s23, 1
        %p202 = scmp.lt.s32.totalorder %s22, 0
        %s203 = scalar_select %p202, %s22, 0
        %s204 = smul.addr %s203, 2
        %s205 = smul.addr %s201, 2
        %s206 = sadd.s32 %s204, %s205
        %s207 = smul.addr %s206, 4
        %s208 = scalar_lea.vmem %s0, %s207
        %p209 = pneg %p53
        %p210 = pneg %p50
        %p211 = scmp.lt.s32.totalorder %s22, 0
        %s212 = scalar_select %p211, %s22, 0
        %s213 = smul.addr %s212, 4
        %s214 = scalar_lea.vmem %s1, %s213
        %p215 = pneg %p79
        %p216 = pneg %p76
        %p217 = pneg %p100
        %p218 = pneg %p97
        %p219 = pneg %p121
        %p220 = pneg %p118
        %p221 = pneg %p149
        %p222 = pneg %p146
        %s223 = sand.u32 %s136, 1
        %s224 = scalar_lea.sflag [#allocation3], %s223
        %s225 = sand.u32 %s136, 1
        %s226 = smul.addr %s225, 8
        %s227 = scalar_lea.vmem [#allocation2], %s226
        %p228 = scmp.lt.s32.totalorder %s23, 1
        %s229 = scalar_select %p228, %s23, 1
        %p230 = scmp.lt.s32.totalorder %s22, 0
        %s231 = scalar_select %p230, %s22, 0
        %s232 = smul.addr %s231, 2
        %s233 = smul.addr %s229, 2
        %s234 = sadd.s32 %s232, %s233
        %s235 = smul.addr %s234, 4
        %s236 = scalar_lea.vmem %s0, %s235
        %p237 = scmp.lt.s32.totalorder %s22, 0
        %s238 = scalar_select %p237, %s22, 0
        %s239 = smul.addr %s238, 4
        %s240 = scalar_lea.vmem %s1, %s239
        %v241 = vld [vmem:[%s236] sm:$0xff]
        %243 = vst [vmem:[#allocation1] ss:$2 sm:$0xff] %v241
        %v244 = vld.sshfl [vmem:[#allocation1] sm:$0xff pattern:$0x75316420]
        %v245 = vld.sshfl [vmem:[#allocation1 + $0x8] sm:$0xff pattern:$0x75316420]
        %248 = vrot.lane.b32.xlu0 %v244, 1
        %v249 = vpop.permute.xlu0 %248
        %250 = vrot.lane.b32.xlu0 %v245, 1
        %v251 = vpop.permute.xlu0 %250
        %v252 = vlaneseq
        %v253 = vand.u32 %v252, 127
        %vm254 = vcmp.lt.s32.totalorder %v253, 1
        %v255 = vsel %vm254, %v249, %v251
        %v256 = vsel %vm254, %v251, %v249
        %v257 = vld [vmem:[%s2] sm:$0x3]
        %v259 = vperm.slane %v257, 0
        %v260 = vperm.slane %v257, 1
        %v263 = vmul.f32 %v256, %v259
        %v264 = vmul.f32 %v255, %v260
        %265 = vst [vmem:[#allocation1] ss:$2 sm:$0xff] %v241
        %v266 = vld.sshfl [vmem:[#allocation1] sm:$0xff pattern:$0x75316420]
        %v267 = vld.sshfl [vmem:[#allocation1 + $0x8] sm:$0xff pattern:$0x75316420]
        %270 = vrot.lane.b32.xlu0 %v266, 127
        %v271 = vpop.permute.xlu0 %270
        %272 = vrot.lane.b32.xlu0 %v267, 127
        %v273 = vpop.permute.xlu0 %272
        %vm274 = vcmp.lt.s32.totalorder %v253, 127
        %v275 = vsel %vm274, %v271, %v273
        %v276 = vsel %vm274, %v273, %v271
        %s277 = scalar_lea.vmem %s2, 4
        %v278 = vld [vmem:[%s277] sm:$0x3]
        %v280 = vperm.slane %v278, 0
        %v281 = vperm.slane %v278, 1
        %v284 = vmul.f32 %v275, %v280
        %v285 = vmul.f32 %v276, %v281
        %v286 = vld [vmem:[%s240] sm:$0xf]
        %288 = vset.pattern.permute.xlu0 0
        %289 = vperm.xlu0 %288, %v286
        %v290 = vpop.permute.xlu0 %289
        %v292 = vmul.f32 %v290, %v263
        %v293 = vmul.f32 %v290, %v264
        %s294 = scalar_lea.vmem %s240, 4
        %v295 = vld [vmem:[%s294] sm:$0xf]
        %297 = vset.pattern.permute.xlu0 0
        %298 = vperm.xlu0 %297, %v295
        %v299 = vpop.permute.xlu0 %298
        %301 = vst [vmem:[#allocation1] ss:$2 sm:$0xff] %v241
        %v302 = vld.sshfl [vmem:[#allocation1] sm:$0xff pattern:$0x75316420]
        %v303 = vld.sshfl [vmem:[#allocation1 + $0x8] sm:$0xff pattern:$0x75316420]
        %v306 = vmul.f32 %v299, %v302
        %v307 = vmul.f32 %v299, %v303
        %v308 = vadd.f32 %v292, %v306
        %v309 = vadd.f32 %v293, %v307
        %s310 = scalar_lea.vmem %s240, 8
        %v311 = vld [vmem:[%s310] sm:$0xf]
        %313 = vset.pattern.permute.xlu0 0
        %314 = vperm.xlu0 %313, %v311
        %v315 = vpop.permute.xlu0 %314
        %v317 = vmul.f32 %v315, %v284
        %v318 = vmul.f32 %v315, %v285
        %v319 = vadd.f32 %v308, %v317
        %v320 = vadd.f32 %v309, %v318
        %321 = vrot.lane.b32.xlu0 %v319, 16
        %v322 = vpop.permute.xlu0 %321
        %323 = vrot.lane.b32.xlu0 %v320, 16
        %v324 = vpop.permute.xlu0 %323
        %vm325 = vcmp.lt.s32.totalorder %v253, 16
        %v326 = vsel %vm325, %v322, %v324
        %v327 = vsel %vm325, %v324, %v322
        %v328 = vld [vmem:[%s3] sm:$0x3]
        %v330 = vperm.slane %v328, 0
        %v331 = vperm.slane %v328, 1
        %v334 = vmul.f32 %v327, %v330
        %v335 = vmul.f32 %v326, %v331
        %s336 = scalar_lea.vmem %s240, 12
        %v337 = vld [vmem:[%s336] sm:$0xf]
        %339 = vset.pattern.permute.xlu0 0
        %340 = vperm.xlu0 %339, %v337
        %v341 = vpop.permute.xlu0 %340
        %v343 = vmul.f32 %v341, %v263
        %v344 = vmul.f32 %v341, %v264
        %s345 = scalar_lea.vmem %s240, 16
        %v346 = vld [vmem:[%s345] sm:$0xf]
        %348 = vset.pattern.permute.xlu0 0
        %349 = vperm.xlu0 %348, %v346
        %v350 = vpop.permute.xlu0 %349
        %352 = vst [vmem:[#allocation1] ss:$2 sm:$0xff] %v241
        %v353 = vld.sshfl [vmem:[#allocation1] sm:$0xff pattern:$0x75316420]
        %v354 = vld.sshfl [vmem:[#allocation1 + $0x8] sm:$0xff pattern:$0x75316420]
        %v357 = vmul.f32 %v350, %v353
        %v358 = vmul.f32 %v350, %v354
        %v359 = vadd.f32 %v343, %v357
        %v360 = vadd.f32 %v344, %v358
        %s361 = scalar_lea.vmem %s240, 20
        %v362 = vld [vmem:[%s361] sm:$0xf]
        %364 = vset.pattern.permute.xlu0 0
        %365 = vperm.xlu0 %364, %v362
        %v366 = vpop.permute.xlu0 %365
        %v368 = vmul.f32 %v366, %v284
        %v369 = vmul.f32 %v366, %v285
        %v370 = vadd.f32 %v359, %v368
        %v371 = vadd.f32 %v360, %v369
        %v372 = vadd.f32 %v334, %v370
        %v373 = vadd.f32 %v335, %v371
        %s374 = scalar_lea.vmem %s240, 24
        %v375 = vld [vmem:[%s374] sm:$0xf]
        %377 = vset.pattern.permute.xlu0 0
        %378 = vperm.xlu0 %377, %v375
        %v379 = vpop.permute.xlu0 %378
        %v381 = vmul.f32 %v379, %v263
        %v382 = vmul.f32 %v379, %v264
        %s383 = scalar_lea.vmem %s240, 28
        %v384 = vld [vmem:[%s383] sm:$0xf]
        %386 = vset.pattern.permute.xlu0 0
        %387 = vperm.xlu0 %386, %v384
        %v388 = vpop.permute.xlu0 %387
        %390 = vst [vmem:[#allocation1] ss:$2 sm:$0xff] %v241
        %v391 = vld.sshfl [vmem:[#allocation1] sm:$0xff pattern:$0x75316420]
        %v392 = vld.sshfl [vmem:[#allocation1 + $0x8] sm:$0xff pattern:$0x75316420]
        %v395 = vmul.f32 %v388, %v391
        %v396 = vmul.f32 %v388, %v392
        %v397 = vadd.f32 %v381, %v395
        %v398 = vadd.f32 %v382, %v396
        %s399 = scalar_lea.vmem %s240, 32
        %v400 = vld [vmem:[%s399] sm:$0xf]
        %402 = vset.pattern.permute.xlu0 0
        %403 = vperm.xlu0 %402, %v400
        %v404 = vpop.permute.xlu0 %403
        %v406 = vmul.f32 %v404, %v284
        %v407 = vmul.f32 %v404, %v285
        %v408 = vadd.f32 %v397, %v406
        %v409 = vadd.f32 %v398, %v407
        %410 = vrot.lane.b32.xlu0 %v408, 112
        %v411 = vpop.permute.xlu0 %410
        %412 = vrot.lane.b32.xlu0 %v409, 112
        %v413 = vpop.permute.xlu0 %412
        %vm414 = vcmp.lt.s32.totalorder %v253, 112
        %v415 = vsel %vm414, %v411, %v413
        %v416 = vsel %vm414, %v413, %v411
        %s417 = scalar_lea.vmem %s3, 4
        %v418 = vld [vmem:[%s417] sm:$0x3]
        %v420 = vperm.slane %v418, 0
        %v421 = vperm.slane %v418, 1
        %v424 = vmul.f32 %v415, %v420
        %v425 = vmul.f32 %v416, %v421
        %v426 = vadd.f32 %v372, %v424
        %v427 = vadd.f32 %v373, %v425
        %v430 = vrot.slane %v427, 4
        %vm431 = vcmask 1043456
        %v432 = vsel %vm431, %v426, %v430
        %434 = vst [vmem:[%s227] sm:$0xff] %v432
        %s435 = sand.u32 %s136, 1
        %s436 = scalar_lea.sflag [#allocation3], %s435
        %s437 = sand.u32 %s136, 1
        %s438 = smul.addr %s437, 8
        %s439 = scalar_lea.vmem [#allocation2], %s438
        // Predicated region
        $region37: #{tpu_custom_call.1} parent=35 // pred_check
          %p440 = pneg %p146
        $region38: #{tpu_custom_call.1} parent=35 // pred_check_branch
          %442 = sbr.rel (%p440) target = $region40
        $region39: #{tpu_custom_call.1} parent=35 // pred_region
          %444 = vsyncadd %s436, 0
          %s445 = smul.addr %s22, 2
          %s446 = smul.addr %s23, 2
          %s447 = sadd.s32 %s445, %s446
          %s448 = smul.addr %s447, 4
          %s449 = scalar_lea.hbm %s4, %s448
          %s451 = sshll.u32 %s439, 4
          %s452 = int_to_ptr.vmem [resolvable:$true] %s451
          %s453 = sshll.u32 %s449, 4
          %s454 = int_to_ptr.hbm [resolvable:$true] %s453
          %456 = dma.vmem_to_hbm [thread:$0]  %s452, 128, %s454, %s436
        $region40: #{tpu_custom_call.1} parent=35 // pred_fallthru
          _
      $region36: #{tpu_custom_call.1} parent=5 // pred_fallthru
        _
      %p457 = scmp.le.s32.totalorder 2, %s13
      // Predicated region
      $region41: #{tpu_custom_call.1} parent=5 // pred_check
        %p458 = pneg %p457
      $region42: #{tpu_custom_call.1} parent=5 // pred_check_branch
        %460 = sbr.rel (%p458) target = $region44
      $region43: #{tpu_custom_call.1} parent=5 // pred_region
        %s461 = ssub.s32 %s13, 2
        // Predicated region
        $region45: #{tpu_custom_call.1} parent=43 // pred_check
          %p462 = pneg %p152
        $region46: #{tpu_custom_call.1} parent=43 // pred_check_branch
          %464 = sbr.rel (%p462) target = $region48
        $region47: #{tpu_custom_call.1} parent=43 // pred_region
          %s465 = sand.u32 %s137, 1
          %s466 = scalar_lea.sflag [#allocation3], %s465
          %s467 = sand.u32 %s137, 1
          %s468 = smul.addr %s467, 8
          %s469 = scalar_lea.vmem [#allocation2], %s468
          %471 = dma.done %s466, 128
        $region48: #{tpu_custom_call.1} parent=43 // pred_fallthru
          _
      $region44: #{tpu_custom_call.1} parent=5 // pred_fallthru
        _
    $region6: #{tpu_custom_call.1} parent=1 // loop_footer
      %s17 = sadd.s32 1, %s13
    $region7: #{tpu_custom_call.1} parent=1 // loop_footer_branch
      %12 = sbr.rel target = $region3
    $region8: #{tpu_custom_call.1} parent=1 // loop_exit
      _
    %472 = vsyncpa [#allocation3], 1
    %s473 = scalar_lea.sflag [#allocation3], 1
    %474 = vsyncpa %s473, 1

</llo_original>
